<compile_context>
chip_gen: v5e
topology: v5e:2x2
jax: 0.10.0
libtpu: 0.0.40
codegen_flags: <defaults>
</compile_context>

<pallas_src>
import functools
import math

import jax
import jax.numpy as jnp
import numpy as np
from jax.experimental import pallas as pl
from jax.experimental.pallas import tpu as pltpu


_INV_SQRT2 = 1.0 / math.sqrt(2.0)


def _exact_gelu(y):
    # PyTorch nn.GELU() default: exact erf-based GELU (computed in f32).
    return 0.5 * y * (1.0 + jax.lax.erf(y * _INV_SQRT2))


def delsum_head_kernel(x_ref, ws_ref, bs_ref, u_ref, out_ref, h_ref, *, precision):
    # x_ref  : (1, TN, W)      activation tile for (batch bi, row-tile ni)
    # ws_ref : (1, W, W)       splitter weight for quantizer q, PRE-TRANSPOSED: h = x @ ws
    # bs_ref : (1, 1, W)       splitter bias slice for quantizer q
    # u_ref  : (1, W, TV)      unembed tile for quantizer q, PRE-TRANSPOSED: logits = h @ u
    # out_ref: (1, 1, TN, TV)  logits tile placed at (bi, q, ni, vi) of (b, Q, n, Vp)
    # h_ref  : (TN, W)         VMEM scratch; splitter output reused across vocab tiles
    vi = pl.program_id(3)

    @pl.when(vi == 0)
    def _():
        # Splitter Linear + GELU, once per (bi, q, ni).  MXU accumulates in f32;
        # bias-add / GELU stay in f32.
        h = jnp.dot(x_ref[0], ws_ref[0],
                    preferred_element_type=jnp.float32, precision=precision)
        h = h + bs_ref[0].astype(jnp.float32)
        h_ref[...] = _exact_gelu(h).astype(h_ref.dtype)

    # Unembed for this vocab tile: MXU in the weight dtype, f32 accumulation,
    # single cast for the lane-dense store.
    logits = jnp.dot(h_ref[...], u_ref[0],
                     preferred_element_type=jnp.float32, precision=precision)
    out_ref[0, 0] = logits.astype(out_ref.dtype)


def prepare_delsum_head_params(Ws, bs, U):
    """One-time host-side weight layout prep.  Call at model load, NOT per forward.

    Ws: (Q*W, W)  splitter Linear weight (PyTorch out_features x in_features)
    bs: (Q*W,)    splitter Linear bias
    U : (Q, V, W) per-quantizer unembed matrices (logits_q = h_q @ U[q].T)
    """
    Q, V, W = U.shape
    assert Ws.shape == (Q * W, W) and bs.shape == (Q * W,)
    ws_t = jnp.swapaxes(Ws.reshape(Q, W, W), 1, 2)   # (Q, W, W): h = x @ ws_t[q]
    bs3 = bs.reshape(Q, 1, W)                        # (Q, 1, W)
    u_t = jnp.swapaxes(U, 1, 2)                      # (Q, W, V): logits = h @ u_t[q]
    # Pad vocab to a 128-lane multiple -> unmasked stores on the logits writeback
    # (the dominant HBM traffic).  Padded columns come out as exact zeros.
    Vp = max(128, -(-V // 128) * 128)
    if Vp != V:
        u_t = jnp.pad(u_t, ((0, 0), (0, 0), (0, Vp - V)))
    return {"ws_t": ws_t, "bs": bs3, "u_t": u_t, "vocab": V}


def _vmem_capacity_bytes():
    try:
        return int(pltpu.get_tpu_info().vmem_capacity_bytes)
    except Exception:
        return 64 << 20          # conservative fallback (v7x per-TC physical VMEM)


def _row_tiling(n, target):
    """Pick a row tile (multiple of 8, bounded by target) and the padded row count."""
    target = max(8, (target // 8) * 8)
    if n <= target:
        tn = -(-n // 8) * 8
        return tn, tn
    for t in range(target, 7, -8):           # multiples of 8, descending
        if n % t == 0:
            return t, n
    # No exact divisor <= target: pad n to a multiple of target; a bounded tile
    # beats one giant un-pipelined block.
    return target, -(-n // target) * target


def _choose_tiles(n, W, Vp, xb, wb, ob, row_target, budget):
    """Pick (tn, tv, n_pad, block_bytes) so the working set fits the VMEM budget."""
    tn, n_pad = _row_tiling(n, row_target)
    tv_cands = [d for d in range(Vp, 127, -128) if Vp % d == 0] or [Vp]

    def blk(tn_, tv_):
        return (2 * tn_ * W * xb          # x tile, double-buffered
                + 2 * W * W * wb          # splitter weight
                + 2 * W * wb              # bias
                + 2 * W * tv_ * wb        # unembed tile
                + 2 * tn_ * tv_ * ob      # logits tile
                + tn_ * W * wb)           # h scratch (single buffer)

    while True:
        tv = next((t for t in tv_cands if blk(tn, t) <= budget), tv_cands[-1])
        if blk(tn, tv) <= budget or tn < 16 or tn % 16 != 0:
            return tn, tv, n_pad, blk(tn, tv)
        tn //= 2                           # n_pad stays divisible by tn


def delsum_head_forward(x, params, *, row_tile=512, out_dtype=None,
                        trim_vocab=True, precision=None):
    """DelSumHead forward.

    x: (b, n, W) activations; params from prepare_delsum_head_params().
    Returns (b, Q, n, V) logits (== torch.stack([...], dim=1)).  With
    trim_vocab=False the lane-padded (b, Q, n, Vp) logits are returned so the
    consumer can fuse the vocab trim into its softmax / loss (saves one full
    HBM round-trip of the largest tensor).
    """
    ws_t, bs3, u_t = params["ws_t"], params["bs"], params["u_t"]
    V = params["vocab"]
    Q, W, _ = ws_t.shape
    Vp = u_t.shape[-1]
    b, n, Wx = x.shape
    assert Wx == W
    if out_dtype is None:
        out_dtype = x.dtype

    xb = jnp.dtype(x.dtype).itemsize
    wb = jnp.dtype(u_t.dtype).itemsize
    ob = jnp.dtype(out_dtype).itemsize

    cap = _vmem_capacity_bytes()
    budget = max(int(cap * 0.75) - (2 << 20), 16 << 20)
    tn, tv, n_pad, blk_bytes = _choose_tiles(n, W, Vp, xb, wb, ob, row_tile, budget)

    # Generation-aware limit; never clamped below the actual block requirement.
    vmem_limit = max(min(int(cap * 0.9), max(blk_bytes + (4 << 20), 32 << 20)),
                     blk_bytes + (2 << 20))

    if n_pad != n:
        x = jnp.pad(x, ((0, 0), (0, n_pad - n), (0, 0)))

    grid = (b, Q, n_pad // tn, Vp // tv)

    out = pl.pallas_call(
        functools.partial(delsum_head_kernel, precision=precision),
        out_shape=jax.ShapeDtypeStruct((b, Q, n_pad, Vp), out_dtype),
        grid_spec=pltpu.PrefetchScalarGridSpec(
            num_scalar_prefetch=0,
            grid=grid,
            in_specs=[
                pl.BlockSpec((1, tn, W), lambda bi, qi, ni, vi: (bi, ni, 0)),
                pl.BlockSpec((1, W, W), lambda bi, qi, ni, vi: (qi, 0, 0)),
                pl.BlockSpec((1, 1, W), lambda bi, qi, ni, vi: (qi, 0, 0)),
                pl.BlockSpec((1, W, tv), lambda bi, qi, ni, vi: (qi, 0, vi)),
            ],
            out_specs=pl.BlockSpec(
                (1, 1, tn, tv), lambda bi, qi, ni, vi: (bi, qi, ni, vi)
            ),
            scratch_shapes=[pltpu.VMEM((tn, W), u_t.dtype)],
        ),
        compiler_params=pltpu.CompilerParams(
            dimension_semantics=("parallel", "parallel", "parallel", "arbitrary"),
            vmem_limit_bytes=int(vmem_limit),
        ),
    )(x, ws_t, bs3, u_t)

    if n_pad != n or (trim_vocab and Vp != V):
        out = out[:, :, :n, : (V if trim_vocab else Vp)]
    return out


def delsum_head_reference(x, Ws, bs, U):
    b, n, W = x.shape
    Q, V, _ = U.shape
    y = jnp.einsum("bnw,ow->bno", x, Ws) + bs            # (b, n, Q*W)
    y = _exact_gelu(y)
    split = y.reshape(b, n, Q, W)
    return jnp.stack(
        [jnp.einsum("bnw,vw->bnv", split[:, :, q], U[q]) for q in range(Q)],
        axis=1,
    )


if __name__ == "__main__":
    # Small, module-consistent shapes.
    quantizers = 4
    n_head = 2
    head_width = 16
    width = n_head * head_width       # 32
    vocab = 128                       # per-quantizer unembed vocab (lane multiple)
    b, n = 2, 8

    key = jax.random.PRNGKey(0)
    kx, kw, kb, ku = jax.random.split(key, 4)

    x = jax.random.normal(kx, (b, n, width), dtype=jnp.float32)
    # splitter Linear(width, width*quantizers): weight (Q*W, W), bias (Q*W,)
    Ws = jax.random.normal(kw, (quantizers * width, width), dtype=jnp.float32) * 0.05
    bs = jax.random.normal(kb, (quantizers * width,), dtype=jnp.float32) * 0.05
    # per-quantizer unembed matrices (vocab, width)
    U = jax.random.normal(ku, (quantizers, vocab, width), dtype=jnp.float32) * 0.05

    ref = delsum_head_reference(x, Ws, bs, U)

    # f32 path.
    params = prepare_delsum_head_params(Ws, bs, U)      # one-time prep
    out = jax.block_until_ready(delsum_head_forward(x, params))
    assert out.shape == (b, quantizers, n, vocab), out.shape
    np.testing.assert_allclose(np.asarray(out), np.asarray(ref), rtol=1e-4, atol=1e-4)

    # bf16 production path (full-rate MXU, half the logits writeback, f32 accumulation):
    # validated against the f32 reference with bf16-appropriate tolerance.
    params_bf16 = prepare_delsum_head_params(
        Ws.astype(jnp.bfloat16), bs.astype(jnp.bfloat16), U.astype(jnp.bfloat16)
    )
    out_bf16 = jax.block_until_ready(
        delsum_head_forward(x.astype(jnp.bfloat16), params_bf16, out_dtype=jnp.bfloat16)
    )
    assert out_bf16.shape == (b, quantizers, n, vocab), out_bf16.shape
    np.testing.assert_allclose(
        np.asarray(out_bf16, dtype=np.float32), np.asarray(ref), rtol=5e-2, atol=2e-2
    )

    print("KERNEL_OK")
</pallas_src>

<mosaic_0001>
module attributes {stable_mosaic.version = 11 : i64} {
  func.func @delsum_head_kernel(%arg0: i32, %arg1: i32, %arg2: i32, %arg3: i32, %arg4: memref<1x8x32xf32, #tpu.memory_space<vmem>>, %arg5: memref<1x32x32xf32, #tpu.memory_space<vmem>>, %arg6: memref<1x1x32xf32, #tpu.memory_space<vmem>>, %arg7: memref<1x32x128xf32, #tpu.memory_space<vmem>>, %arg8: memref<1x1x8x128xf32, #tpu.memory_space<vmem>>, %arg9: memref<8x32xf32, #tpu.memory_space<vmem>>) attributes {dimension_semantics = [#tpu.dimension_semantics<parallel>, #tpu.dimension_semantics<parallel>, #tpu.dimension_semantics<parallel>, #tpu.dimension_semantics<arbitrary>], iteration_bounds = array<i64: 2, 4, 1, 1>, scalar_prefetch = 0 : i64, scratch_operands = 1 : i64, tpu.core_type = #tpu.core_type<tc>, window_params = [{transform_indices = @transform_0, window_bounds = array<i64: 1, 8, 32>}, {transform_indices = @transform_1, window_bounds = array<i64: 1, 32, 32>}, {transform_indices = @transform_2, window_bounds = array<i64: 1, 1, 32>}, {transform_indices = @transform_3, window_bounds = array<i64: 1, 32, 128>}, {transform_indices = @transform_4, window_bounds = array<i64: 1, 1, 8, 128>}]} {
    %c0_i32 = arith.constant 0 : i32
    %0 = arith.cmpi eq, %arg3, %c0_i32 : i32
    %1 = arith.extui %0 : i1 to i32
    %c0_i32_0 = arith.constant 0 : i32
    %2 = arith.cmpi ne, %1, %c0_i32_0 : i32
    scf.if %2 {
      %c0_9 = arith.constant 0 : index
      %c0_10 = arith.constant 0 : index
      %c0_11 = arith.constant 0 : index
      %10 = vector.load %arg4[%c0_9, %c0_10, %c0_11] : memref<1x8x32xf32, #tpu.memory_space<vmem>>, vector<1x8x32xf32>
      %11 = vector.shape_cast %10 : vector<1x8x32xf32> to vector<8x32xf32>
      %c0_12 = arith.constant 0 : index
      %c0_13 = arith.constant 0 : index
      %c0_14 = arith.constant 0 : index
      %12 = vector.load %arg5[%c0_12, %c0_13, %c0_14] : memref<1x32x32xf32, #tpu.memory_space<vmem>>, vector<1x32x32xf32>
      %13 = vector.shape_cast %12 : vector<1x32x32xf32> to vector<32x32xf32>
      %cst_15 = arith.constant dense<0.000000e+00> : vector<8x32xf32>
      %14 = tpu.matmul %11, %13, %cst_15 {dimension_numbers = #tpu.dot_dimension_numbers<[1], [0], [0], [1], [0, 0, 1, 1], [], []>} : vector<8x32xf32>, vector<32x32xf32>, vector<8x32xf32> -> vector<8x32xf32>
      %c0_16 = arith.constant 0 : index
      %c0_17 = arith.constant 0 : index
      %c0_18 = arith.constant 0 : index
      %15 = vector.load %arg6[%c0_16, %c0_17, %c0_18] : memref<1x1x32xf32, #tpu.memory_space<vmem>>, vector<1x1x32xf32>
      %16 = vector.shape_cast %15 : vector<1x1x32xf32> to vector<1x32xf32>
      %17 = vector.broadcast %16 : vector<1x32xf32> to vector<8x32xf32>
      %18 = arith.addf %14, %17 : vector<8x32xf32>
      %cst_19 = arith.constant 5.000000e-01 : f32
      %19 = vector.broadcast %cst_19 : f32 to vector<8x32xf32>
      %20 = arith.mulf %19, %18 : vector<8x32xf32>
      %cst_20 = arith.constant 0.707106769 : f32
      %21 = vector.broadcast %cst_20 : f32 to vector<8x32xf32>
      %22 = arith.mulf %18, %21 : vector<8x32xf32>
      %23 = math.erf %22 : vector<8x32xf32>
      %cst_21 = arith.constant 1.000000e+00 : f32
      %24 = vector.broadcast %cst_21 : f32 to vector<8x32xf32>
      %25 = arith.addf %24, %23 : vector<8x32xf32>
      %26 = arith.mulf %20, %25 : vector<8x32xf32>
      %c0_22 = arith.constant 0 : index
      %c0_23 = arith.constant 0 : index
      %27 = vector.load %arg9[%c0_22, %c0_23] : memref<8x32xf32, #tpu.memory_space<vmem>>, vector<8x32xf32>
      tpu.vector_store %arg9[%c0_22, %c0_23], %26 {strides = array<i32>} : memref<8x32xf32, #tpu.memory_space<vmem>>, vector<8x32xf32>,
    } else {
    }
    %c0 = arith.constant 0 : index
    %c0_1 = arith.constant 0 : index
    %3 = vector.load %arg9[%c0, %c0_1] : memref<8x32xf32, #tpu.memory_space<vmem>>, vector<8x32xf32>
    %c0_2 = arith.constant 0 : index
    %c0_3 = arith.constant 0 : index
    %c0_4 = arith.constant 0 : index
    %4 = vector.load %arg7[%c0_2, %c0_3, %c0_4] : memref<1x32x128xf32, #tpu.memory_space<vmem>>, vector<1x32x128xf32>
    %5 = vector.shape_cast %4 : vector<1x32x128xf32> to vector<32x128xf32>
    %cst = arith.constant dense<0.000000e+00> : vector<8x128xf32>
    %6 = tpu.matmul %3, %5, %cst {dimension_numbers = #tpu.dot_dimension_numbers<[1], [0], [0], [1], [0, 0, 1, 1], [], []>} : vector<8x32xf32>, vector<32x128xf32>, vector<8x128xf32> -> vector<8x128xf32>
    %c0_5 = arith.constant 0 : index
    %c0_6 = arith.constant 0 : index
    %c0_7 = arith.constant 0 : index
    %c0_8 = arith.constant 0 : index
    %7 = vector.load %arg8[%c0_5, %c0_6, %c0_7, %c0_8] : memref<1x1x8x128xf32, #tpu.memory_space<vmem>>, vector<1x1x8x128xf32>
    %8 = vector.shape_cast %7 : vector<1x1x8x128xf32> to vector<8x128xf32>
    %9 = vector.shape_cast %6 : vector<8x128xf32> to vector<1x1x8x128xf32>
    tpu.vector_store %arg8[%c0_5, %c0_6, %c0_7, %c0_8], %9 {strides = array<i32>} : memref<1x1x8x128xf32, #tpu.memory_space<vmem>>, vector<1x1x8x128xf32>,
    return
  }
  func.func @transform_0(%arg0: i32, %arg1: i32, %arg2: i32, %arg3: i32) -> (i32, i32, i32) {
    %c0_i32 = arith.constant 0 : i32
    %c0_i32_0 = arith.constant 0 : i32
    return %arg0, %arg2, %c0_i32 : i32, i32, i32
  }
  func.func @transform_1(%arg0: i32, %arg1: i32, %arg2: i32, %arg3: i32) -> (i32, i32, i32) {
    %c0_i32 = arith.constant 0 : i32
    %c0_i32_0 = arith.constant 0 : i32
    %c0_i32_1 = arith.constant 0 : i32
    return %arg1, %c0_i32, %c0_i32_0 : i32, i32, i32
  }
  func.func @transform_2(%arg0: i32, %arg1: i32, %arg2: i32, %arg3: i32) -> (i32, i32, i32) {
    %c0_i32 = arith.constant 0 : i32
    %c0_i32_0 = arith.constant 0 : i32
    %c0_i32_1 = arith.constant 0 : i32
    return %arg1, %c0_i32, %c0_i32_0 : i32, i32, i32
  }
  func.func @transform_3(%arg0: i32, %arg1: i32, %arg2: i32, %arg3: i32) -> (i32, i32, i32) {
    %c0_i32 = arith.constant 0 : i32
    %c0_i32_0 = arith.constant 0 : i32
    return %arg1, %c0_i32, %arg3 : i32, i32, i32
  }
  func.func @transform_4(%arg0: i32, %arg1: i32, %arg2: i32, %arg3: i32) -> (i32, i32, i32, i32) {
    %c0_i32 = arith.constant 0 : i32
    return %arg0, %arg1, %arg2, %arg3 : i32, i32, i32, i32
  }
}

</mosaic_0001>

<llo_original>
// kernel: tpu_custom_call.1
$region0: #{tpu_custom_call.1}
  #allocation0 [shape = 'u32[]', space=smem, size = 0x4, offset = 0x4, fixed_abs, tag = 'smem constant byte address 0x4 - core index']
  #allocation1 [shape = 'u32[72,128]{1,0:T(1,128)}', space=vmem, size = 0x9000, scoped, tag = 'internal scratch']
  #allocation2 [shape = 'f32[8,32]{1,0:T(8,128)}', space=vmem, size = 0x1000, scoped, tag = 'scratch operand']
  %s0 = inlined_call_operand.hbm [shape: f32[2,8,32], index: 0, kind: input, shape index: {}]
  %s1 = inlined_call_operand.hbm [shape: f32[4,32,32], index: 1, kind: input, shape index: {}]
  %s2 = inlined_call_operand.hbm [shape: f32[4,1,32], index: 2, kind: input, shape index: {}]
  %s3 = inlined_call_operand.hbm [shape: f32[4,32,128], index: 3, kind: input, shape index: {}]
  %s4 = inlined_call_operand.hbm [shape: f32[2,4,8,128], index: 4, kind: output, shape index: {}]
  %s5 = sld [smem:[#allocation0]]
  $region69: #{tpu_custom_call.1} parent=0
    _
  %s7 = ssub.s32 1, %s5
  %s8 = scalar_select 0, %s7, %s5
  $region1: #{tpu_custom_call.1} parent=0
    #allocation3 [shape = 'u8[8192]{0}', space=vmem, size = 0x2000, scoped, tag = 'input window, operand 0']
    #allocation4 [shape = 's32[2]{0}', space=sflag, size = 0x8, scoped, tag = 'scoped memory for tpu_custom_call.1']
    #allocation5 [shape = 's32[2]{0}', space=sflag, size = 0x8, scoped, tag = 'scoped memory for tpu_custom_call.1']
    #allocation6 [shape = 'u8[32768]{0}', space=vmem, size = 0x8000, scoped, tag = 'input window, operand 1']
    #allocation7 [shape = 's32[2]{0}', space=sflag, size = 0x8, scoped, tag = 'scoped memory for tpu_custom_call.1']
    #allocation8 [shape = 'u8[1024]{0}', space=vmem, size = 0x400, scoped, tag = 'input window, operand 2']
    #allocation9 [shape = 'u8[32768]{0}', space=vmem, size = 0x8000, scoped, tag = 'input window, operand 3']
    #allocation10 [shape = 's32[2]{0}', space=sflag, size = 0x8, scoped, tag = 'scoped memory for tpu_custom_call.1']
    #allocation11 [shape = 'u8[8192]{0}', space=vmem, size = 0x2000, scoped, tag = 'output window, operand 0']
    %9 = vsyncpa [#allocation4], 0
    %s10 = scalar_lea.sflag [#allocation4], 1
    %11 = vsyncpa %s10, 0
    %12 = vsyncpa [#allocation7], 0
    %s13 = scalar_lea.sflag [#allocation7], 1
    %14 = vsyncpa %s13, 0
    %15 = vsyncpa [#allocation10], 0
    %s16 = scalar_lea.sflag [#allocation10], 1
    %17 = vsyncpa %s16, 0
    %18 = vsyncpa [#allocation5], 0
    %s19 = scalar_lea.sflag [#allocation5], 1
    %20 = vsyncpa %s19, 0
    loop: start=0, step=1, limit=10
    $region2: #{tpu_custom_call.1} parent=1 // loop_pre_header
      _
    $region3: #{tpu_custom_call.1} parent=1 // loop_header
      %s22 = sphi 0, %s26
      %p23 = scmp.ge.s32.totalorder %s22, 10
      %s29 = sphi 0, %s55
      %s30 = sphi 0, %s51
      %s31 = sphi 0, %s47
      %s32 = sphi 0, %s43
      %s33 = sphi 0, %s29
      %s34 = sphi 0, %s30
      %s35 = sphi 0, %s31
      %s36 = sphi 0, %s32
      %s37 = sphi 0, %s33
      %s38 = sphi 0, %s34
      %s39 = sphi 0, %s35
      %s40 = sphi 0, %s36
      %s60 = sphi 0, %s62
      %s63 = sphi 0, %s60
      %s64 = sphi 0, %s63
      %s80 = sphi 0, %s64
      %s86 = sphi 0, %s88
      %s89 = sphi 0, %s86
      %s90 = sphi 0, %s89
      %s106 = sphi 0, %s90
      %s112 = sphi 0, %s114
      %s115 = sphi 0, %s112
      %s116 = sphi 0, %s115
      %s132 = sphi 0, %s116
      %s140 = sphi 0, %s142
      %s143 = sphi 0, %s140
      %s144 = sphi 0, %s143
      %s160 = sphi 0, %s144
      %s172 = sphi 0, %s174
      %s175 = sphi 0, %s172
      %s176 = sphi 0, %s175
      %s192 = sphi 0, %s176
    $region4: #{tpu_custom_call.1} parent=1 // loop_header_branch
      %25 = sbr.rel (%p23) target = $region8
    $region5: #{tpu_custom_call.1} parent=1 // loop_body
      %s27 = ssub.s32 %s22, 1
      %s28 = ssub.s32 %s22, 2
      %s41 = sadd.s32 1, %s32
      %p42 = scmp.ge.s32.totalorder %s41, 1
      %s43 = scalar_select %p42, 0, %s41
      %s44 = sadd.s32 1, %s31
      %s45 = scalar_select %p42, %s44, %s31
      %p46 = scmp.ge.s32.totalorder %s45, 1
      %s47 = scalar_select %p46, 0, %s45
      %s48 = sadd.s32 1, %s30
      %s49 = scalar_select %p46, %s48, %s30
      %p50 = scmp.ge.s32.totalorder %s49, 4
      %s51 = scalar_select %p50, 0, %s49
      %s52 = sadd.s32 1, %s29
      %s53 = scalar_select %p50, %s52, %s29
      %p54 = scmp.ge.s32.totalorder %s53, 2
      %s55 = scalar_select %p54, 0, %s53
      %s56 = ssub.s32 %s29, %s55
      %s57 = ssub.s32 %s31, %s47
      %s58 = sor.u32 %s56, %s57
      %p59 = scmp.eq.s32.totalorder %s58, 0
      %s61 = sadd.s32 %s60, 1
      %s62 = scalar_select %p59, %s60, %s61
      %p65 = pneg %p59
      %p66 = scmp.eq.s32.totalorder %s22, 7
      %p67 = por %p65, %p66
      %p68 = scmp.ne.s32.totalorder %s60, %s63
      %p69 = scmp.eq.s32.totalorder %s22, 0
      %p70 = por %p68, %p69
      %p71 = scmp.ne.s32.totalorder %s60, %s63
      %p72 = scmp.eq.s32.totalorder %s27, 7
      %p73 = por %p71, %p72
      %p74 = scmp.ne.s32.totalorder %s63, %s64
      %p75 = scmp.eq.s32.totalorder %s27, 0
      %p76 = por %p74, %p75
      %p77 = scmp.ne.s32.totalorder %s63, %s64
      %p78 = scmp.eq.s32.totalorder %s28, 7
      %p79 = por %p77, %p78
      %p81 = scmp.ne.s32.totalorder %s64, %s80
      %p82 = scmp.eq.s32.totalorder %s28, 0
      %p83 = por %p81, %p82
      %s84 = ssub.s32 %s30, %s51
      %p85 = scmp.eq.s32.totalorder %s84, 0
      %s87 = sadd.s32 %s86, 1
      %s88 = scalar_select %p85, %s86, %s87
      %p91 = pneg %p85
      %p92 = scmp.eq.s32.totalorder %s22, 7
      %p93 = por %p91, %p92
      %p94 = scmp.ne.s32.totalorder %s86, %s89
      %p95 = scmp.eq.s32.totalorder %s22, 0
      %p96 = por %p94, %p95
      %p97 = scmp.ne.s32.totalorder %s86, %s89
      %p98 = scmp.eq.s32.totalorder %s27, 7
      %p99 = por %p97, %p98
      %p100 = scmp.ne.s32.totalorder %s89, %s90
      %p101 = scmp.eq.s32.totalorder %s27, 0
      %p102 = por %p100, %p101
      %p103 = scmp.ne.s32.totalorder %s89, %s90
      %p104 = scmp.eq.s32.totalorder %s28, 7
      %p105 = por %p103, %p104
      %p107 = scmp.ne.s32.totalorder %s90, %s106
      %p108 = scmp.eq.s32.totalorder %s28, 0
      %p109 = por %p107, %p108
      %s110 = ssub.s32 %s30, %s51
      %p111 = scmp.eq.s32.totalorder %s110, 0
      %s113 = sadd.s32 %s112, 1
      %s114 = scalar_select %p111, %s112, %s113
      %p117 = pneg %p111
      %p118 = scmp.eq.s32.totalorder %s22, 7
      %p119 = por %p117, %p118
      %p120 = scmp.ne.s32.totalorder %s112, %s115
      %p121 = scmp.eq.s32.totalorder %s22, 0
      %p122 = por %p120, %p121
      %p123 = scmp.ne.s32.totalorder %s112, %s115
      %p124 = scmp.eq.s32.totalorder %s27, 7
      %p125 = por %p123, %p124
      %p126 = scmp.ne.s32.totalorder %s115, %s116
      %p127 = scmp.eq.s32.totalorder %s27, 0
      %p128 = por %p126, %p127
      %p129 = scmp.ne.s32.totalorder %s115, %s116
      %p130 = scmp.eq.s32.totalorder %s28, 7
      %p131 = por %p129, %p130
      %p133 = scmp.ne.s32.totalorder %s116, %s132
      %p134 = scmp.eq.s32.totalorder %s28, 0
      %p135 = por %p133, %p134
      %s136 = ssub.s32 %s30, %s51
      %s137 = ssub.s32 %s32, %s43
      %s138 = sor.u32 %s136, %s137
      %p139 = scmp.eq.s32.totalorder %s138, 0
      %s141 = sadd.s32 %s140, 1
      %s142 = scalar_select %p139, %s140, %s141
      %p145 = pneg %p139
      %p146 = scmp.eq.s32.totalorder %s22, 7
      %p147 = por %p145, %p146
      %p148 = scmp.ne.s32.totalorder %s140, %s143
      %p149 = scmp.eq.s32.totalorder %s22, 0
      %p150 = por %p148, %p149
      %p151 = scmp.ne.s32.totalorder %s140, %s143
      %p152 = scmp.eq.s32.totalorder %s27, 7
      %p153 = por %p151, %p152
      %p154 = scmp.ne.s32.totalorder %s143, %s144
      %p155 = scmp.eq.s32.totalorder %s27, 0
      %p156 = por %p154, %p155
      %p157 = scmp.ne.s32.totalorder %s143, %s144
      %p158 = scmp.eq.s32.totalorder %s28, 7
      %p159 = por %p157, %p158
      %p161 = scmp.ne.s32.totalorder %s144, %s160
      %p162 = scmp.eq.s32.totalorder %s28, 0
      %p163 = por %p161, %p162
      %s164 = ssub.s32 %s29, %s55
      %s165 = ssub.s32 %s30, %s51
      %s166 = sor.u32 %s164, %s165
      %s167 = ssub.s32 %s31, %s47
      %s168 = sor.u32 %s166, %s167
      %s169 = ssub.s32 %s32, %s43
      %s170 = sor.u32 %s168, %s169
      %p171 = scmp.eq.s32.totalorder %s170, 0
      %s173 = sadd.s32 %s172, 1
      %s174 = scalar_select %p171, %s172, %s173
      %p177 = pneg %p171
      %p178 = scmp.eq.s32.totalorder %s22, 7
      %p179 = por %p177, %p178
      %p180 = scmp.ne.s32.totalorder %s172, %s175
      %p181 = scmp.eq.s32.totalorder %s22, 0
      %p182 = por %p180, %p181
      %p183 = scmp.ne.s32.totalorder %s172, %s175
      %p184 = scmp.eq.s32.totalorder %s27, 7
      %p185 = por %p183, %p184
      %p186 = scmp.ne.s32.totalorder %s175, %s176
      %p187 = scmp.eq.s32.totalorder %s27, 0
      %p188 = por %p186, %p187
      %p189 = scmp.ne.s32.totalorder %s175, %s176
      %p190 = scmp.eq.s32.totalorder %s28, 7
      %p191 = por %p189, %p190
      %p193 = scmp.ne.s32.totalorder %s176, %s192
      %p194 = scmp.eq.s32.totalorder %s28, 0
      %p195 = por %p193, %p194
      %p196 = scmp.le.s32.totalorder 1, %s22
      %p197 = scmp.lt.s32.totalorder %s22, 9
      %p198 = pnand %p196, %p197
      %p199 = pneg %p198
      // Predicated region
      $region9: #{tpu_custom_call.1} parent=5 // pred_check
        _
      $region10: #{tpu_custom_call.1} parent=5 // pred_check_branch
        %201 = sbr.rel (%p198) target = $region12
      $region11: #{tpu_custom_call.1} parent=5 // pred_region
        %s202 = ssub.s32 %s22, 1
      $region12: #{tpu_custom_call.1} parent=5 // pred_fallthru
        _
      %p203 = scmp.lt.s32.totalorder %s22, 8
      // Predicated region
      $region13: #{tpu_custom_call.1} parent=5 // pred_check
        %p204 = pneg %p203
      $region14: #{tpu_custom_call.1} parent=5 // pred_check_branch
        %206 = sbr.rel (%p204) target = $region16
      $region15: #{tpu_custom_call.1} parent=5 // pred_region
        // Predicated region
        $region17: #{tpu_custom_call.1} parent=15 // pred_check
          %p207 = pneg %p70
        $region18: #{tpu_custom_call.1} parent=15 // pred_check_branch
          %209 = sbr.rel (%p207) target = $region20
        $region19: #{tpu_custom_call.1} parent=15 // pred_region
          %s210 = sand.u32 %s60, 1
          %s211 = scalar_lea.sflag [#allocation4], %s210
          %s212 = sand.u32 %s60, 1
          %s213 = smul.addr %s212, 8
          %s214 = scalar_lea.vmem [#allocation3], %s213
          %216 = vsyncadd %s211, 0
          %s217 = sadd.s32 %s31, %s29
          %s218 = smul.addr %s217, 8
          %s219 = scalar_lea.hbm %s0, %s218
          %s221 = sshll.u32 %s219, 4
          %s222 = int_to_ptr.hbm [resolvable:$true] %s221
          %s223 = sshll.u32 %s214, 4
          %s224 = int_to_ptr.vmem [resolvable:$true] %s223
          %226 = dma.hbm_to_vmem [thread:$0]  %s222, 128, %s224, %s211
        $region20: #{tpu_custom_call.1} parent=15 // pred_fallthru
          _
        // Predicated region
        $region21: #{tpu_custom_call.1} parent=15 // pred_check
          %p227 = pneg %p96
        $region22: #{tpu_custom_call.1} parent=15 // pred_check_branch
          %229 = sbr.rel (%p227) target = $region24
        $region23: #{tpu_custom_call.1} parent=15 // pred_region
          %s230 = sand.u32 %s22, 1
          %s231 = scalar_lea.sflag [#allocation7], %s230
          %s232 = sand.u32 %s86, 1
          %s233 = smul.addr %s232, 32
          %s234 = scalar_lea.vmem [#allocation6], %s233
          %236 = vsyncadd %s231, 0
          %s237 = smul.addr %s30, 4
          %s238 = smul.addr %s237, 8
          %s239 = scalar_lea.hbm %s1, %s238
          %s240 = sshll.u32 %s239, 4
          %s241 = int_to_ptr.hbm [resolvable:$true] %s240
          %s242 = sshll.u32 %s234, 4
          %s243 = int_to_ptr.vmem [resolvable:$true] %s242
          %248 = dma.hbm_to_vmem [thread:$0]  %s241, 512, %s243, %s231, 128, 128, 8
        $region24: #{tpu_custom_call.1} parent=15 // pred_fallthru
          _
        // Predicated region
        $region25: #{tpu_custom_call.1} parent=15 // pred_check
          %p249 = pneg %p122
        $region26: #{tpu_custom_call.1} parent=15 // pred_check_branch
          %251 = sbr.rel (%p249) target = $region28
        $region27: #{tpu_custom_call.1} parent=15 // pred_region
          %s252 = sand.u32 %s22, 1
          %s253 = scalar_lea.sflag [#allocation7], %s252
          %s254 = sand.u32 %s112, 1
          %s255 = scalar_lea.vmem [#allocation8], %s254
          %257 = vsyncadd %s253, 0
          %s258 = scalar_lea.hbm %s2, %s30
          %s260 = sshll.u32 %s258, 4
          %s261 = int_to_ptr.hbm [resolvable:$true] %s260
          %s262 = sshll.u32 %s255, 4
          %s263 = int_to_ptr.vmem [resolvable:$true] %s262
          %265 = dma.hbm_to_vmem [thread:$0]  %s261, 16, %s263, %s253
        $region28: #{tpu_custom_call.1} parent=15 // pred_fallthru
          _
        // Predicated region
        $region29: #{tpu_custom_call.1} parent=15 // pred_check
          %p266 = pneg %p150
        $region30: #{tpu_custom_call.1} parent=15 // pred_check_branch
          %268 = sbr.rel (%p266) target = $region32
        $region31: #{tpu_custom_call.1} parent=15 // pred_region
          %s269 = sand.u32 %s140, 1
          %s270 = scalar_lea.sflag [#allocation10], %s269
          %s271 = sand.u32 %s140, 1
          %s272 = smul.addr %s271, 32
          %s273 = scalar_lea.vmem [#allocation9], %s272
          %275 = vsyncadd %s270, 0
          %s276 = smul.addr %s30, 4
          %s277 = sadd.s32 %s32, %s276
          %s278 = smul.addr %s277, 8
          %s279 = scalar_lea.hbm %s3, %s278
          %s280 = sshll.u32 %s279, 4
          %s281 = int_to_ptr.hbm [resolvable:$true] %s280
          %s282 = sshll.u32 %s273, 4
          %s283 = int_to_ptr.vmem [resolvable:$true] %s282
          %288 = dma.hbm_to_vmem [thread:$0]  %s281, 512, %s283, %s270, 128, 128, 8
        $region32: #{tpu_custom_call.1} parent=15 // pred_fallthru
          _
      $region16: #{tpu_custom_call.1} parent=5 // pred_fallthru
        _
      %p289 = scmp.le.s32.totalorder 1, %s22
      %p290 = scmp.lt.s32.totalorder %s22, 9
      %p291 = pnand %p289, %p290
      %p292 = pneg %p291
      // Predicated region
      $region33: #{tpu_custom_call.1} parent=5 // pred_check
        _
      $region34: #{tpu_custom_call.1} parent=5 // pred_check_branch
        %294 = sbr.rel (%p291) target = $region36
      $region35: #{tpu_custom_call.1} parent=5 // pred_region
        %s295 = ssub.s32 %s22, 1
        %s296 = sand.u32 %s63, 1
        %s297 = scalar_lea.sflag [#allocation4], %s296
        %s298 = sand.u32 %s63, 1
        %s299 = smul.addr %s298, 8
        %s300 = scalar_lea.vmem [#allocation3], %s299
        // Predicated region
        $region37: #{tpu_custom_call.1} parent=35 // pred_check
          %p301 = pneg %p76
        $region38: #{tpu_custom_call.1} parent=35 // pred_check_branch
          %303 = sbr.rel (%p301) target = $region40
        $region39: #{tpu_custom_call.1} parent=35 // pred_region
          %305 = dma.done %s297, 128
        $region40: #{tpu_custom_call.1} parent=35 // pred_fallthru
          _
        %s306 = sand.u32 %s27, 1
        %s307 = scalar_lea.sflag [#allocation7], %s306
        %s308 = sand.u32 %s89, 1
        %s309 = smul.addr %s308, 32
        %s310 = scalar_lea.vmem [#allocation6], %s309
        // Predicated region
        $region41: #{tpu_custom_call.1} parent=35 // pred_check
          %p311 = pneg %p102
        $region42: #{tpu_custom_call.1} parent=35 // pred_check_branch
          %313 = sbr.rel (%p311) target = $region44
        $region43: #{tpu_custom_call.1} parent=35 // pred_region
          %315 = dma.done %s307, 512
        $region44: #{tpu_custom_call.1} parent=35 // pred_fallthru
          _
        %s316 = sand.u32 %s27, 1
        %s317 = scalar_lea.sflag [#allocation7], %s316
        %s318 = sand.u32 %s115, 1
        %s319 = scalar_lea.vmem [#allocation8], %s318
        // Predicated region
        $region45: #{tpu_custom_call.1} parent=35 // pred_check
          %p320 = pneg %p128
        $region46: #{tpu_custom_call.1} parent=35 // pred_check_branch
          %322 = sbr.rel (%p320) target = $region48
        $region47: #{tpu_custom_call.1} parent=35 // pred_region
          %324 = dma.done %s317, 16
        $region48: #{tpu_custom_call.1} parent=35 // pred_fallthru
          _
        %s325 = sand.u32 %s143, 1
        %s326 = scalar_lea.sflag [#allocation10], %s325
        %s327 = sand.u32 %s143, 1
        %s328 = smul.addr %s327, 32
        %s329 = scalar_lea.vmem [#allocation9], %s328
        // Predicated region
        $region49: #{tpu_custom_call.1} parent=35 // pred_check
          %p330 = pneg %p156
        $region50: #{tpu_custom_call.1} parent=35 // pred_check_branch
          %332 = sbr.rel (%p330) target = $region52
        $region51: #{tpu_custom_call.1} parent=35 // pred_region
          %334 = dma.done %s326, 512
        $region52: #{tpu_custom_call.1} parent=35 // pred_fallthru
          _
        %s335 = sand.u32 %s63, 1
        %s336 = scalar_lea.sflag [#allocation4], %s335
        %s337 = sand.u32 %s63, 1
        %s338 = smul.addr %s337, 8
        %s339 = scalar_lea.vmem [#allocation3], %s338
        %p340 = pneg %p76
        %p341 = pneg %p73
        %s342 = sand.u32 %s27, 1
        %s343 = scalar_lea.sflag [#allocation7], %s342
        %s344 = sand.u32 %s89, 1
        %s345 = smul.addr %s344, 32
        %s346 = scalar_lea.vmem [#allocation6], %s345
        %p347 = pneg %p102
        %p348 = pneg %p99
        %s349 = sand.u32 %s27, 1
        %s350 = scalar_lea.sflag [#allocation7], %s349
        %s351 = sand.u32 %s115, 1
        %s352 = scalar_lea.vmem [#allocation8], %s351
        %p353 = pneg %p128
        %p354 = pneg %p125
        %s355 = sand.u32 %s143, 1
        %s356 = scalar_lea.sflag [#allocation10], %s355
        %s357 = sand.u32 %s143, 1
        %s358 = smul.addr %s357, 32
        %s359 = scalar_lea.vmem [#allocation9], %s358
        %p360 = pneg %p156
        %p361 = pneg %p153
        %p362 = pneg %p188
        %p363 = pneg %p185
        %s364 = sand.u32 %s175, 1
        %s365 = scalar_lea.sflag [#allocation5], %s364
        %s366 = sand.u32 %s175, 1
        %s367 = smul.addr %s366, 8
        %s368 = scalar_lea.vmem [#allocation11], %s367
        %p369 = scmp.eq.s32.totalorder %s36, 0
        // Predicated region
        $region53: #{tpu_custom_call.1} parent=35 // pred_check
          %p370 = pneg %p369
        $region54: #{tpu_custom_call.1} parent=35 // pred_check_branch
          %372 = sbr.rel (%p370) target = $region56
        $region55: #{tpu_custom_call.1} parent=35 // pred_region
          %v373 = vld [vmem:[%s300] sm:$0xff]
          %v374 = vld [vmem:[%s310] sm:$0xff]
          %v375 = vld [vmem:[%s310 + $0x8] sm:$0xff]
          %v376 = vld [vmem:[%s310 + $0x10] sm:$0xff]
          %v377 = vld [vmem:[%s310 + $0x18] sm:$0xff]
          %v378 = vld [vmem:[%s319] sm:$0x1]
          %v380 = vperm.slane %v378, 0
          %vm382 = vcmask 261120
          %v384 = vsel %vm382, %v373, 0
          %386 = vmatpush.msra.mxu0 0.0
          %387 = vmatpush.msra.mxu0 0.0
          %388 = vmatpush.msra.mxu0 0.0
          %389 = vmatpush.msra.mxu0 0.0
          %390 = vmatpush.msra.mxu0 0.0
          %391 = vmatpush.msra.mxu0 0.0
          %392 = vmatpush.msra.mxu0 0.0
          %393 = vmatpush.msra.mxu0 0.0
          %394 = vmatpush.msra.mxu0 0.0
          %395 = vmatpush.msra.mxu0 0.0
          %396 = vmatpush.msra.mxu0 0.0
          %397 = vmatpush.msra.mxu0 0.0
          %398 = vmatpush.msra.mxu0 %v377
          %399 = vmatpush.msra.mxu0 %v376
          %400 = vmatpush.msra.mxu0 %v375
          %401 = vmatpush.msra.mxu0 %v374
          %402 = vmatmul.f32.gmra.mxu0 %v384
          %v403 = vpop.f32.mrf.mxu0
          %v404 = vadd.f32 %v380, %v403
          %405 = vdwg.mxu0
          %v406 = vmul.f32 %v404, 0.5
          %v407 = vmul.f32 %v404, 0.70710677
          %v408 = vmul.f32 %v407, %v407
          %v409 = vmin.f32 16.0, %v408
          %v410 = vmul.f32 %v409, 2.1237322e-06
          %v411 = vadd.f32 %v410, 0.00028619796
          %v412 = vmul.f32 %v409, %v411
          %v413 = vadd.f32 %v412, 0.0036580483
          %v414 = vmul.f32 %v409, %v413
          %v415 = vadd.f32 %v414, 0.05243302
          %v416 = vmul.f32 %v409, %v415
          %v417 = vadd.f32 %v416, 0.18741608
          %v418 = vmul.f32 %v409, %v417
          %v419 = vadd.f32 %v418, 1.1283791
          %v420 = vmul.f32 %v407, %v419
          %v421 = vmul.f32 %v409, 3.8918573e-05
          %v422 = vadd.f32 %v421, 0.001143296
          %v423 = vmul.f32 %v409, %v422
          %v424 = vadd.f32 %v423, 0.014752088
          %v425 = vmul.f32 %v409, %v424
          %v426 = vadd.f32 %v425, 0.112945676
          %v427 = vmul.f32 %v409, %v426
          %v428 = vadd.f32 %v427, 0.4994258
          %v429 = vmul.f32 %v409, %v428
          %v430 = vadd.f32 %v429, 1.0
          %v431 = vrcp.pop %v430
          %v432 = vmul.f32 %v430, %v431
          %v433 = vsub.f32 1.0, %v432
          %v434 = vmul.f32 %v431, %v433
          %v435 = vadd.f32 %v431, %v434
          %vm436 = vweird.f32 %v430
          %vm437 = vweird.f32 %v431
          %vm438 = vmor %vm436, %vm437
          %v439 = vsel %vm438, %v431, %v435
          %v440 = vand.u32 2147483647, %v430
          %vm441 = vcmp.eq.f32.partialorder %v440, 8.507059e+37
          %v442 = vand.u32 %v430, 2147483648
          %v443 = vor.u32 1.1754944e-38, %v442
          %v444 = vsel %vm441, %v443, %v439
          %v445 = vmul.f32 %v420, %v444
          %v446 = vmin.f32 %v445, 1.0
          %v447 = vmax.f32 %v446, -1.0
          %v448 = vadd.f32 %v447, 1.0
          %v449 = vmul.f32 %v406, %v448
          %450 = vst.msk [vmem:[#allocation2] sm:$0xff] %vm382, %v449
        $region56: #{tpu_custom_call.1} parent=35 // pred_fallthru
          _
        %v451 = vld [vmem:[#allocation2] sm:$0xff]
        %v452 = vld [vmem:[%s329] sm:$0xff]
        %v453 = vld [vmem:[%s329 + $0x8] sm:$0xff]
        %v454 = vld [vmem:[%s329 + $0x10] sm:$0xff]
        %v455 = vld [vmem:[%s329 + $0x18] sm:$0xff]
        %vm456 = vcmask 261120
        %v458 = vsel %vm456, %v451, 0
        %460 = vmatpush.msra.mxu0 0.0
        %461 = vmatpush.msra.mxu0 0.0
        %462 = vmatpush.msra.mxu0 0.0
        %463 = vmatpush.msra.mxu0 0.0
        %464 = vmatpush.msra.mxu0 0.0
        %465 = vmatpush.msra.mxu0 0.0
        %466 = vmatpush.msra.mxu0 0.0
        %467 = vmatpush.msra.mxu0 0.0
        %468 = vmatpush.msra.mxu0 0.0
        %469 = vmatpush.msra.mxu0 0.0
        %470 = vmatpush.msra.mxu0 0.0
        %471 = vmatpush.msra.mxu0 0.0
        %472 = vmatpush.msra.mxu0 %v455
        %473 = vmatpush.msra.mxu0 %v454
        %474 = vmatpush.msra.mxu0 %v453
        %475 = vmatpush.msra.mxu0 %v452
        %476 = vmatmul.f32.gmra.mxu0 %v458
        %v477 = vpop.f32.mrf.mxu0
        %v478 = vadd.f32 0.0, %v477
        %479 = vdwg.mxu0
        %480 = vst [vmem:[%s368] sm:$0xff] %v478
        %s481 = sand.u32 %s175, 1
        %s482 = scalar_lea.sflag [#allocation5], %s481
        %s483 = sand.u32 %s175, 1
        %s484 = smul.addr %s483, 8
        %s485 = scalar_lea.vmem [#allocation11], %s484
        // Predicated region
        $region57: #{tpu_custom_call.1} parent=35 // pred_check
          %p486 = pneg %p185
        $region58: #{tpu_custom_call.1} parent=35 // pred_check_branch
          %488 = sbr.rel (%p486) target = $region60
        $region59: #{tpu_custom_call.1} parent=35 // pred_region
          %490 = vsyncadd %s482, 0
          %s491 = sadd.s32 %s36, %s35
          %s492 = sadd.s32 %s491, %s34
          %s493 = smul.addr %s33, 4
          %s494 = sadd.s32 %s492, %s493
          %s495 = smul.addr %s494, 8
          %s496 = scalar_lea.hbm %s4, %s495
          %s498 = sshll.u32 %s485, 4
          %s499 = int_to_ptr.vmem [resolvable:$true] %s498
          %s500 = sshll.u32 %s496, 4
          %s501 = int_to_ptr.hbm [resolvable:$true] %s500
          %503 = dma.vmem_to_hbm [thread:$0]  %s499, 128, %s501, %s482
        $region60: #{tpu_custom_call.1} parent=35 // pred_fallthru
          _
      $region36: #{tpu_custom_call.1} parent=5 // pred_fallthru
        _
      %p504 = scmp.le.s32.totalorder 2, %s22
      // Predicated region
      $region61: #{tpu_custom_call.1} parent=5 // pred_check
        %p505 = pneg %p504
      $region62: #{tpu_custom_call.1} parent=5 // pred_check_branch
        %507 = sbr.rel (%p505) target = $region64
      $region63: #{tpu_custom_call.1} parent=5 // pred_region
        %s508 = ssub.s32 %s22, 2
        // Predicated region
        $region65: #{tpu_custom_call.1} parent=63 // pred_check
          %p509 = pneg %p191
        $region66: #{tpu_custom_call.1} parent=63 // pred_check_branch
          %511 = sbr.rel (%p509) target = $region68
        $region67: #{tpu_custom_call.1} parent=63 // pred_region
          %s512 = sand.u32 %s176, 1
          %s513 = scalar_lea.sflag [#allocation5], %s512
          %s514 = sand.u32 %s176, 1
          %s515 = smul.addr %s514, 8
          %s516 = scalar_lea.vmem [#allocation11], %s515
          %518 = dma.done %s513, 128
        $region68: #{tpu_custom_call.1} parent=63 // pred_fallthru
          _
      $region64: #{tpu_custom_call.1} parent=5 // pred_fallthru
        _
    $region6: #{tpu_custom_call.1} parent=1 // loop_footer
      %s26 = sadd.s32 1, %s22
    $region7: #{tpu_custom_call.1} parent=1 // loop_footer_branch
      %21 = sbr.rel target = $region3
    $region8: #{tpu_custom_call.1} parent=1 // loop_exit
      _
    %519 = vsyncpa [#allocation4], 1
    %s520 = scalar_lea.sflag [#allocation4], 1
    %521 = vsyncpa %s520, 1
    %522 = vsyncpa [#allocation7], 1
    %s523 = scalar_lea.sflag [#allocation7], 1
    %524 = vsyncpa %s523, 1
    %525 = vsyncpa [#allocation10], 1
    %s526 = scalar_lea.sflag [#allocation10], 1
    %527 = vsyncpa %s526, 1
    %528 = vsyncpa [#allocation5], 1
    %s529 = scalar_lea.sflag [#allocation5], 1
    %530 = vsyncpa %s529, 1

</llo_original>
